<compile_context>
chip_gen: v7x
topology: tpu7x:2x2x1
jax: 0.10.0
libtpu: 0.0.40
codegen_flags: <defaults>
</compile_context>

<pallas_src>
import functools
import math

import jax
import jax.numpy as jnp
from jax.experimental import pallas as pl
from jax.experimental.pallas import tpu as pltpu


def _round_up(x, m):
    return ((x + m - 1) // m) * m


def _vmem_capacity_bytes():
    """Per-core VMEM capacity; conservative 64 MiB (v7x) if the query fails."""
    try:
        info = pltpu.get_tpu_info()
        cap = getattr(info, "vmem_capacity_bytes", None)
        if cap:
            return int(cap)
    except Exception:
        pass
    return 64 * 1024 * 1024


def _mlp_kernel(*refs, num_layers, activation, approx_recip):
    """Fused MLP on one batch tile.

    refs layout: (x_ref, w0, b0, w1, b1, ..., w{L-1}, b{L-1}, out_ref)
      x_ref : (TB, In_pad)          w_i : (In_pad_i, Out_pad_i)   b_i : (1, Out_pad_i) f32
      out_ref: (TB, out_cols)       out_cols == output_dim (<128) or Out_pad (lane-dense)
    Intermediate activations live only as values (vregs / VMEM temporaries); no HBM traffic.
    """
    x_ref = refs[0]
    out_ref = refs[-1]
    wb = refs[1:-1]

    h = x_ref[...]
    for i in range(num_layers):
        w = wb[2 * i][...]
        b = wb[2 * i + 1][...]
        # MXU matmul with f32 accumulation; bias add + activation in f32 epilogue.
        h = jnp.dot(h.astype(w.dtype), w, preferred_element_type=jnp.float32)
        h = h + b  # (1, Out_pad) broadcasts over TB rows
        if i < num_layers - 1:
            if activation == "relu":
                h = jnp.maximum(h, 0.0)
            elif activation == "sigmoid":
                # EUP-only sigmoid: exp and reciprocal both issue on the EUP slot,
                # which co-issues with MXU pushes (free when matmul-bound).
                h = pl.reciprocal(1.0 + jnp.exp(-h), approx=approx_recip)
            # any other activation string (e.g. the default 'Sigmoid') applies nothing,
            # exactly matching the PyTorch module's string comparisons.
    odim = out_ref.shape[-1]
    out_ref[...] = h[:, :odim].astype(out_ref.dtype)


class MlpPallas:
    """JAX/Pallas mirror of the PyTorch Mlp module (forward pass only).

    Note: hidden sizes that are multiples of 256 double per-pass MXU occupancy on
    v6e/v7x (2x256^2 MXU); multiples of 128 are ideal for v5e (4x128^2). Padding here
    stays at 128 granularity — it never burns extra FLOPs for dims you didn't choose.
    """

    def __init__(self, input_dim, output_dim, layer_dims=(), activation="Sigmoid",
                 key=None, dtype=jnp.float32, param_dtype=jnp.bfloat16, block_batch=512):
        if key is None:
            key = jax.random.PRNGKey(0)
        self.activation = activation
        self.input_dim = input_dim
        self.output_dim = output_dim
        self.dtype = dtype
        # bf16 weights by default (MXU native rate, half the HBM->VMEM bytes); pass
        # param_dtype=jnp.float32 for tight numeric agreement with an f32 reference.
        self.param_dtype = param_dtype
        self.block_batch = block_batch

        self.dims = [input_dim] + list(layer_dims) + [output_dim]
        # Lane-dense feature dims: pad everything the kernel touches to a multiple of 128.
        self.padded_dims = [_round_up(d, 128) for d in self.dims]

        self.params = []         # (W (out,in), b (out,)) — PyTorch layout, for the reference
        self.padded_params = []  # (W_t (pad_in, pad_out), b (1, pad_out) f32) — kernel layout
        for i in range(len(self.dims) - 1):
            fan_in, fan_out = self.dims[i], self.dims[i + 1]
            key, kw, kb = jax.random.split(key, 3)
            bound = 1.0 / math.sqrt(fan_in)  # PyTorch nn.Linear default init range
            W = jax.random.uniform(kw, (fan_out, fan_in), dtype, -bound, bound)
            b = jax.random.uniform(kb, (fan_out,), dtype, -bound, bound)
            self.params.append((W, b))

            p_in, p_out = self.padded_dims[i], self.padded_dims[i + 1]
            # Pre-transpose once; zero-pad so padded lanes contribute exactly 0 downstream.
            W_t = jnp.zeros((p_in, p_out), self.param_dtype)
            W_t = W_t.at[:fan_in, :fan_out].set(W.T.astype(self.param_dtype))
            b_p = jnp.zeros((1, p_out), jnp.float32)
            b_p = b_p.at[:, :fan_out].set(b.astype(jnp.float32))
            self.padded_params.append((W_t, b_p))

    def __call__(self, x):
        B, in_feat = x.shape
        assert in_feat == self.input_dim, (in_feat, self.input_dim)
        num_layers = len(self.padded_params)
        p_in = self.padded_dims[0]
        p_out = self.padded_dims[-1]
        max_dim = max(self.padded_dims)

        # Batch tiling: sublane-aligned tile; aim for >=2 grid steps (v7x megacore + DMA
        # overlap) and shrink the tile when intermediates are wide (VMEM pressure).
        bb = min(self.block_batch, 256) if max_dim >= 4096 else self.block_batch
        n_tiles_target = max(2, pl.cdiv(B, bb))
        TB = max(8, _round_up(pl.cdiv(B, n_tiles_target), 8))
        grid = (pl.cdiv(B, TB),)

        # Only pad the feature dim (lane-dense); the batch axis keeps its true size — the
        # last grid block overhangs and its out-of-bounds rows are masked on store.
        x_p = x if in_feat == p_in else jnp.pad(x, ((0, 0), (0, p_in - in_feat)))

        # Output layout: unpadded (masked store, no write amplification / XLA slice) when
        # output_dim < 128, lane-dense padded otherwise.
        out_cols = self.output_dim if self.output_dim < 128 else p_out

        in_specs = [pl.BlockSpec((TB, p_in), lambda i: (i, 0))]
        flat_inputs = [x_p]
        for (W_t, b_p) in self.padded_params:
            # Constant index maps -> resident across grid steps; Buffered(1) -> no wasted
            # second VMEM buffer for blocks that are never re-fetched.
            in_specs.append(pl.BlockSpec(W_t.shape, lambda i: (0, 0),
                                         pipeline_mode=pl.Buffered(1)))
            in_specs.append(pl.BlockSpec(b_p.shape, lambda i: (0, 0),
                                         pipeline_mode=pl.Buffered(1)))
            flat_inputs.extend([W_t, b_p])

        out_specs = pl.BlockSpec((TB, out_cols), lambda i: (i, 0))
        out_shape = jax.ShapeDtypeStruct((B, out_cols), x.dtype)

        # Advisory cost estimate for XLA's scheduler (true batch, not padded).
        flops = 0
        transcendentals = 0
        bytes_accessed = x_p.size * x_p.dtype.itemsize + B * out_cols * x.dtype.itemsize
        for li in range(num_layers):
            pi, po = self.padded_dims[li], self.padded_dims[li + 1]
            flops += 2 * B * pi * po
            if li < num_layers - 1 and self.activation == "sigmoid":
                transcendentals += B * po
            W_t, b_p = self.padded_params[li]
            bytes_accessed += W_t.size * W_t.dtype.itemsize + b_p.size * b_p.dtype.itemsize
        cost = pl.CostEstimate(flops=int(flops), transcendentals=int(transcendentals),
                               bytes_accessed=int(bytes_accessed))

        # VMEM budget: params counted ONCE (Buffered(1)), double-buffered x/out blocks,
        # ~2 live f32 intermediates (compiler-materialized VMEM temporaries), plus slack
        # for Mosaic internal scratch. Cap with generation-aware headroom (~20% of VMEM).
        param_bytes = sum(W.size * W.dtype.itemsize + b.size * b.dtype.itemsize
                          for (W, b) in self.padded_params)
        io_bytes = 2 * (TB * p_in + TB * out_cols) * x.dtype.itemsize
        inter_bytes = 2 * TB * max_dim * 4
        want = param_bytes + io_bytes + inter_bytes + (4 << 20)
        vmem_cap = _vmem_capacity_bytes()
        headroom = max(8 << 20, vmem_cap // 5)
        vmem_limit = int(max(16 << 20, min(want, vmem_cap - headroom)))

        # Exact reciprocal keeps the f32-parameter path bit-tight; approx recip (pure EUP)
        # is used when weights are already bf16 (its error is far below the bf16 noise).
        approx_recip = jnp.dtype(self.param_dtype) != jnp.dtype(jnp.float32)

        kernel = functools.partial(_mlp_kernel, num_layers=num_layers,
                                   activation=self.activation,
                                   approx_recip=approx_recip)
        out_p = pl.pallas_call(
            kernel,
            out_shape=out_shape,
            grid=grid,
            in_specs=in_specs,
            out_specs=out_specs,
            compiler_params=pltpu.CompilerParams(
                dimension_semantics=("parallel",),  # shards batch tiles across TCs on v7x
                vmem_limit_bytes=vmem_limit),
            cost_estimate=cost,
        )(*flat_inputs)

        # Strip feature padding only if the lane-dense output path was used.
        if out_cols != self.output_dim:
            out_p = out_p[:, :self.output_dim]
        return out_p

    # Pure-JAX reference for verification (unpadded PyTorch-layout f32 params).
    def reference(self, x):
        n = len(self.params)
        for i, (W, b) in enumerate(self.params):
            x = x @ W.T + b
            if i != n - 1:
                if self.activation == "relu":
                    x = jnp.maximum(x, 0.0)
                elif self.activation == "sigmoid":
                    x = jax.nn.sigmoid(x)
        return x


if __name__ == "__main__":
    key = jax.random.PRNGKey(0)
    kx, kx2, kp1, kp2, kp3 = jax.random.split(key, 5)

    input_dim, output_dim = 16, 8
    layer_dims = [32, 32]

    # Batch of 16 -> two 8-row tiles (>= 2 grid steps so the batch axis actually pipelines
    # and, on v7x, splits across both TensorCores).
    x = jax.random.normal(kx, (16, input_dim), jnp.float32)

    # 1) f32 params + sigmoid hidden activations: exact-recip epilogue, tight tolerance.
    mlp_f32 = MlpPallas(input_dim, output_dim, layer_dims=layer_dims,
                        activation="sigmoid", key=kp1, param_dtype=jnp.float32)
    out = jax.block_until_ready(mlp_f32(x))
    ref = mlp_f32.reference(x)
    assert out.shape == (16, output_dim), out.shape
    assert jnp.allclose(out, ref, atol=2e-5, rtol=2e-5), "mismatch vs reference (f32 sigmoid MLP)"

    # 2) Default bf16 params + relu, ragged batch of 20 (exercises the masked last block).
    x_odd = jax.random.normal(kx2, (20, input_dim), jnp.float32)
    mlp_bf16 = MlpPallas(input_dim, output_dim, layer_dims=layer_dims,
                         activation="relu", key=kp2)
    out_bf = jax.block_until_ready(mlp_bf16(x_odd))
    ref_bf = mlp_bf16.reference(x_odd)
    assert out_bf.shape == (20, output_dim), out_bf.shape
    assert jnp.allclose(out_bf, ref_bf, atol=5e-2, rtol=5e-2), \
        "mismatch vs reference (bf16 relu MLP, dtype-aware tolerance)"

    # 3) Degenerate case: no hidden layers (single Linear, no activation).
    mlp_single = MlpPallas(input_dim, output_dim, layer_dims=[],
                           activation="relu", key=kp3, param_dtype=jnp.float32)
    out2 = jax.block_until_ready(mlp_single(x))
    ref2 = mlp_single.reference(x)
    assert out2.shape == (16, output_dim), out2.shape
    assert jnp.allclose(out2, ref2, atol=2e-5, rtol=2e-5), "mismatch vs reference (single Linear)"

    print("KERNEL_OK")
</pallas_src>

<mosaic_0001>
module attributes {stable_mosaic.version = 11 : i64} {
  func.func @_mlp_kernel(%arg0: i32, %arg1: memref<8x128xf32, #tpu.memory_space<vmem>>, %arg2: memref<128x128xf32, #tpu.memory_space<vmem>>, %arg3: memref<1x128xf32, #tpu.memory_space<vmem>>, %arg4: memref<128x128xf32, #tpu.memory_space<vmem>>, %arg5: memref<1x128xf32, #tpu.memory_space<vmem>>, %arg6: memref<128x128xf32, #tpu.memory_space<vmem>>, %arg7: memref<1x128xf32, #tpu.memory_space<vmem>>, %arg8: memref<8x8xf32, #tpu.memory_space<vmem>>) attributes {dimension_semantics = [#tpu.dimension_semantics<parallel>], iteration_bounds = array<i64: 2>, scalar_prefetch = 0 : i64, scratch_operands = 0 : i64, tpu.core_type = #tpu.core_type<tc>, window_params = [{transform_indices = @transform_0, window_bounds = array<i64: 8, 128>}, {pipeline_mode = #tpu.pipeline_mode<synchronous>, transform_indices = @transform_1, window_bounds = array<i64: 128, 128>}, {pipeline_mode = #tpu.pipeline_mode<synchronous>, transform_indices = @transform_2, window_bounds = array<i64: 1, 128>}, {pipeline_mode = #tpu.pipeline_mode<synchronous>, transform_indices = @transform_3, window_bounds = array<i64: 128, 128>}, {pipeline_mode = #tpu.pipeline_mode<synchronous>, transform_indices = @transform_4, window_bounds = array<i64: 1, 128>}, {pipeline_mode = #tpu.pipeline_mode<synchronous>, transform_indices = @transform_5, window_bounds = array<i64: 128, 128>}, {pipeline_mode = #tpu.pipeline_mode<synchronous>, transform_indices = @transform_6, window_bounds = array<i64: 1, 128>}, {transform_indices = @transform_7, window_bounds = array<i64: 8, 8>}]} {
    %c0 = arith.constant 0 : index
    %c0_0 = arith.constant 0 : index
    %0 = vector.load %arg1[%c0, %c0_0] : memref<8x128xf32, #tpu.memory_space<vmem>>, vector<8x128xf32>
    %c0_1 = arith.constant 0 : index
    %c0_2 = arith.constant 0 : index
    %1 = vector.load %arg2[%c0_1, %c0_2] : memref<128x128xf32, #tpu.memory_space<vmem>>, vector<128x128xf32>
    %c0_3 = arith.constant 0 : index
    %c0_4 = arith.constant 0 : index
    %2 = vector.load %arg3[%c0_3, %c0_4] : memref<1x128xf32, #tpu.memory_space<vmem>>, vector<1x128xf32>
    %cst = arith.constant dense<0.000000e+00> : vector<8x128xf32>
    %3 = tpu.matmul %0, %1, %cst {dimension_numbers = #tpu.dot_dimension_numbers<[1], [0], [0], [1], [0, 0, 1, 1], [], []>} : vector<8x128xf32>, vector<128x128xf32>, vector<8x128xf32> -> vector<8x128xf32>
    %4 = vector.broadcast %2 : vector<1x128xf32> to vector<8x128xf32>
    %5 = arith.addf %3, %4 : vector<8x128xf32>
    %cst_5 = arith.constant 0.000000e+00 : f32
    %6 = vector.broadcast %cst_5 : f32 to vector<8x128xf32>
    %7 = arith.subf %6, %5 : vector<8x128xf32>
    %8 = math.exp %7 : vector<8x128xf32>
    %cst_6 = arith.constant 1.000000e+00 : f32
    %9 = vector.broadcast %cst_6 : f32 to vector<8x128xf32>
    %10 = arith.addf %9, %8 : vector<8x128xf32>
    %11 = tpu.reciprocal %10 : vector<8x128xf32> -> vector<8x128xf32>
    %c0_7 = arith.constant 0 : index
    %c0_8 = arith.constant 0 : index
    %12 = vector.load %arg4[%c0_7, %c0_8] : memref<128x128xf32, #tpu.memory_space<vmem>>, vector<128x128xf32>
    %c0_9 = arith.constant 0 : index
    %c0_10 = arith.constant 0 : index
    %13 = vector.load %arg5[%c0_9, %c0_10] : memref<1x128xf32, #tpu.memory_space<vmem>>, vector<1x128xf32>
    %cst_11 = arith.constant dense<0.000000e+00> : vector<8x128xf32>
    %14 = tpu.matmul %11, %12, %cst_11 {dimension_numbers = #tpu.dot_dimension_numbers<[1], [0], [0], [1], [0, 0, 1, 1], [], []>} : vector<8x128xf32>, vector<128x128xf32>, vector<8x128xf32> -> vector<8x128xf32>
    %15 = vector.broadcast %13 : vector<1x128xf32> to vector<8x128xf32>
    %16 = arith.addf %14, %15 : vector<8x128xf32>
    %cst_12 = arith.constant 0.000000e+00 : f32
    %17 = vector.broadcast %cst_12 : f32 to vector<8x128xf32>
    %18 = arith.subf %17, %16 : vector<8x128xf32>
    %19 = math.exp %18 : vector<8x128xf32>
    %cst_13 = arith.constant 1.000000e+00 : f32
    %20 = vector.broadcast %cst_13 : f32 to vector<8x128xf32>
    %21 = arith.addf %20, %19 : vector<8x128xf32>
    %22 = tpu.reciprocal %21 : vector<8x128xf32> -> vector<8x128xf32>
    %c0_14 = arith.constant 0 : index
    %c0_15 = arith.constant 0 : index
    %23 = vector.load %arg6[%c0_14, %c0_15] : memref<128x128xf32, #tpu.memory_space<vmem>>, vector<128x128xf32>
    %c0_16 = arith.constant 0 : index
    %c0_17 = arith.constant 0 : index
    %24 = vector.load %arg7[%c0_16, %c0_17] : memref<1x128xf32, #tpu.memory_space<vmem>>, vector<1x128xf32>
    %cst_18 = arith.constant dense<0.000000e+00> : vector<8x128xf32>
    %25 = tpu.matmul %22, %23, %cst_18 {dimension_numbers = #tpu.dot_dimension_numbers<[1], [0], [0], [1], [0, 0, 1, 1], [], []>} : vector<8x128xf32>, vector<128x128xf32>, vector<8x128xf32> -> vector<8x128xf32>
    %26 = vector.broadcast %24 : vector<1x128xf32> to vector<8x128xf32>
    %27 = arith.addf %25, %26 : vector<8x128xf32>
    %28 = vector.extract_strided_slice %27 {offsets = [0, 0], sizes = [8, 8], strides = [1, 1]} : vector<8x128xf32> to vector<8x8xf32>
    %c0_19 = arith.constant 0 : index
    %c0_20 = arith.constant 0 : index
    %29 = vector.load %arg8[%c0_19, %c0_20] : memref<8x8xf32, #tpu.memory_space<vmem>>, vector<8x8xf32>
    tpu.vector_store %arg8[%c0_19, %c0_20], %28 {strides = array<i32>} : memref<8x8xf32, #tpu.memory_space<vmem>>, vector<8x8xf32>,
    return
  }
  func.func @transform_0(%arg0: i32) -> (i32, i32) {
    %c0_i32 = arith.constant 0 : i32
    %c0_i32_0 = arith.constant 0 : i32
    return %arg0, %c0_i32 : i32, i32
  }
  func.func @transform_1(%arg0: i32) -> (i32, i32) {
    %c0_i32 = arith.constant 0 : i32
    %c0_i32_0 = arith.constant 0 : i32
    %c0_i32_1 = arith.constant 0 : i32
    return %c0_i32, %c0_i32_0 : i32, i32
  }
  func.func @transform_2(%arg0: i32) -> (i32, i32) {
    %c0_i32 = arith.constant 0 : i32
    %c0_i32_0 = arith.constant 0 : i32
    %c0_i32_1 = arith.constant 0 : i32
    return %c0_i32, %c0_i32_0 : i32, i32
  }
  func.func @transform_3(%arg0: i32) -> (i32, i32) {
    %c0_i32 = arith.constant 0 : i32
    %c0_i32_0 = arith.constant 0 : i32
    %c0_i32_1 = arith.constant 0 : i32
    return %c0_i32, %c0_i32_0 : i32, i32
  }
  func.func @transform_4(%arg0: i32) -> (i32, i32) {
    %c0_i32 = arith.constant 0 : i32
    %c0_i32_0 = arith.constant 0 : i32
    %c0_i32_1 = arith.constant 0 : i32
    return %c0_i32, %c0_i32_0 : i32, i32
  }
  func.func @transform_5(%arg0: i32) -> (i32, i32) {
    %c0_i32 = arith.constant 0 : i32
    %c0_i32_0 = arith.constant 0 : i32
    %c0_i32_1 = arith.constant 0 : i32
    return %c0_i32, %c0_i32_0 : i32, i32
  }
  func.func @transform_6(%arg0: i32) -> (i32, i32) {
    %c0_i32 = arith.constant 0 : i32
    %c0_i32_0 = arith.constant 0 : i32
    %c0_i32_1 = arith.constant 0 : i32
    return %c0_i32, %c0_i32_0 : i32, i32
  }
  func.func @transform_7(%arg0: i32) -> (i32, i32) {
    %c0_i32 = arith.constant 0 : i32
    %c0_i32_0 = arith.constant 0 : i32
    return %arg0, %c0_i32 : i32, i32
  }
}

</mosaic_0001>

<llo_original>
// kernel: tpu_custom_call.1
$region0: #{tpu_custom_call.1}
  #allocation0 [shape = 'u32[]', space=smem, size = 0x4, offset = 0x4, fixed_abs, tag = 'smem constant byte address 0x4 - core index']
  #allocation1 [shape = 'u32[144,128]{1,0:T(1,128)}', space=vmem, size = 0x12000, scoped, tag = 'internal scratch']
  %s0 = inlined_call_operand.hbm [shape: f32[16,128], index: 0, kind: input, shape index: {}]
  %s1 = inlined_call_operand.hbm [shape: f32[128,128], index: 1, kind: input, shape index: {}]
  %s2 = inlined_call_operand.vmem [shape: f32[1,128], index: 2, kind: input, shape index: {}]
  %s3 = inlined_call_operand.hbm [shape: f32[128,128], index: 3, kind: input, shape index: {}]
  %s4 = inlined_call_operand.vmem [shape: f32[1,128], index: 4, kind: input, shape index: {}]
  %s5 = inlined_call_operand.hbm [shape: f32[128,128], index: 5, kind: input, shape index: {}]
  %s6 = inlined_call_operand.vmem [shape: f32[1,128], index: 6, kind: input, shape index: {}]
  %s7 = inlined_call_operand.vmem [shape: f32[16,8], index: 7, kind: output, shape index: {}]
  %s8 = sld [smem:[#allocation0]]
  $region77: #{tpu_custom_call.1} parent=0
    _
  %s10 = ssub.s32 1, %s8
  %s11 = scalar_select 0, %s10, %s8
  $region1: #{tpu_custom_call.1} parent=0
    #allocation2 [shape = 'u8[8192]{0}', space=vmem, size = 0x2000, scoped, tag = 'input window, operand 0']
    #allocation3 [shape = 's32[2]{0}', space=sflag, size = 0x8, scoped, tag = 'scoped memory for tpu_custom_call.1']
    #allocation4 [shape = 'u8[65536]{0}', space=vmem, size = 0x10000, scoped, tag = 'input window, operand 1, single buffered']
    #allocation5 [shape = 's32[1]{0}', space=sflag, size = 0x4, scoped, tag = 'scoped memory for tpu_custom_call.1']
    #allocation6 [shape = 'u8[65536]{0}', space=vmem, size = 0x10000, scoped, tag = 'input window, operand 3, single buffered']
    #allocation7 [shape = 'u8[65536]{0}', space=vmem, size = 0x10000, scoped, tag = 'input window, operand 5, single buffered']
    #allocation8 [shape = 's32[1]{0}', space=sflag, size = 0x4, scoped, tag = 'scoped memory for tpu_custom_call.1']
    %12 = vsyncpa [#allocation3], 0
    %s13 = scalar_lea.sflag [#allocation3], 1
    %14 = vsyncpa %s13, 0
    %15 = vsyncpa [#allocation5], 0
    %16 = vsyncpa [#allocation8], 0
    loop: start=0, step=1, limit=4
    $region2: #{tpu_custom_call.1} parent=1 // loop_pre_header
      _
    $region3: #{tpu_custom_call.1} parent=1 // loop_header
      %s18 = sphi 0, %s22
      %p19 = scmp.ge.s32.totalorder %s18, 4
      %s28 = sphi 0, %s30
      %s31 = sphi 0, %s28
      %s32 = sphi 0, %s31
      %s48 = sphi 0, %s32
      %s52 = sphi 0, %s52
      %s54 = sphi 0, %s52
      %s55 = sphi 0, %s54
      %s69 = sphi 0, %s55
      %s73 = sphi 0, %s73
      %s75 = sphi 0, %s73
      %s76 = sphi 0, %s75
      %s90 = sphi 0, %s76
      %s94 = sphi 0, %s94
      %s96 = sphi 0, %s94
      %s97 = sphi 0, %s96
      %s111 = sphi 0, %s97
      %s115 = sphi 0, %s115
      %s117 = sphi 0, %s115
      %s118 = sphi 0, %s117
      %s132 = sphi 0, %s118
      %s136 = sphi 0, %s136
      %s138 = sphi 0, %s136
      %s139 = sphi 0, %s138
      %s153 = sphi 0, %s139
      %s157 = sphi 0, %s157
      %s159 = sphi 0, %s157
      %s160 = sphi 0, %s159
      %s174 = sphi 0, %s160
      %s180 = sphi 0, %s182
      %s183 = sphi 0, %s180
      %s184 = sphi 0, %s183
      %s200 = sphi 0, %s184
    $region4: #{tpu_custom_call.1} parent=1 // loop_header_branch
      %21 = sbr.rel (%p19) target = $region8
    $region5: #{tpu_custom_call.1} parent=1 // loop_body
      %s23 = ssub.s32 %s18, 1
      %s24 = ssub.s32 %s18, 2
      %s25 = sadd.s32 %s18, 1
      %s26 = ssub.s32 %s18, %s25
      %p27 = scmp.eq.s32.totalorder %s26, 0
      %s29 = sadd.s32 %s28, 1
      %s30 = scalar_select %p27, %s28, %s29
      %p33 = pneg %p27
      %p34 = scmp.eq.s32.totalorder %s18, 1
      %p35 = por %p33, %p34
      %p36 = scmp.ne.s32.totalorder %s28, %s31
      %p37 = scmp.eq.s32.totalorder %s18, 0
      %p38 = por %p36, %p37
      %p39 = scmp.ne.s32.totalorder %s28, %s31
      %p40 = scmp.eq.s32.totalorder %s23, 1
      %p41 = por %p39, %p40
      %p42 = scmp.ne.s32.totalorder %s31, %s32
      %p43 = scmp.eq.s32.totalorder %s23, 0
      %p44 = por %p42, %p43
      %p45 = scmp.ne.s32.totalorder %s31, %s32
      %p46 = scmp.eq.s32.totalorder %s24, 1
      %p47 = por %p45, %p46
      %p49 = scmp.ne.s32.totalorder %s32, %s48
      %p50 = scmp.eq.s32.totalorder %s24, 0
      %p51 = por %p49, %p50
      %s53 = sadd.s32 %s52, 1
      %p56 = scmp.eq.s32.totalorder %s18, 1
      %p57 = scmp.ne.s32.totalorder %s52, %s54
      %p58 = scmp.eq.s32.totalorder %s18, 0
      %p59 = por %p57, %p58
      %p60 = scmp.ne.s32.totalorder %s52, %s54
      %p61 = scmp.eq.s32.totalorder %s23, 1
      %p62 = por %p60, %p61
      %p63 = scmp.ne.s32.totalorder %s54, %s55
      %p64 = scmp.eq.s32.totalorder %s23, 0
      %p65 = por %p63, %p64
      %p66 = scmp.ne.s32.totalorder %s54, %s55
      %p67 = scmp.eq.s32.totalorder %s24, 1
      %p68 = por %p66, %p67
      %p70 = scmp.ne.s32.totalorder %s55, %s69
      %p71 = scmp.eq.s32.totalorder %s24, 0
      %p72 = por %p70, %p71
      %s74 = sadd.s32 %s73, 1
      %p77 = scmp.eq.s32.totalorder %s18, 1
      %p78 = scmp.ne.s32.totalorder %s73, %s75
      %p79 = scmp.eq.s32.totalorder %s18, 0
      %p80 = por %p78, %p79
      %p81 = scmp.ne.s32.totalorder %s73, %s75
      %p82 = scmp.eq.s32.totalorder %s23, 1
      %p83 = por %p81, %p82
      %p84 = scmp.ne.s32.totalorder %s75, %s76
      %p85 = scmp.eq.s32.totalorder %s23, 0
      %p86 = por %p84, %p85
      %p87 = scmp.ne.s32.totalorder %s75, %s76
      %p88 = scmp.eq.s32.totalorder %s24, 1
      %p89 = por %p87, %p88
      %p91 = scmp.ne.s32.totalorder %s76, %s90
      %p92 = scmp.eq.s32.totalorder %s24, 0
      %p93 = por %p91, %p92
      %s95 = sadd.s32 %s94, 1
      %p98 = scmp.eq.s32.totalorder %s18, 1
      %p99 = scmp.ne.s32.totalorder %s94, %s96
      %p100 = scmp.eq.s32.totalorder %s18, 0
      %p101 = por %p99, %p100
      %p102 = scmp.ne.s32.totalorder %s94, %s96
      %p103 = scmp.eq.s32.totalorder %s23, 1
      %p104 = por %p102, %p103
      %p105 = scmp.ne.s32.totalorder %s96, %s97
      %p106 = scmp.eq.s32.totalorder %s23, 0
      %p107 = por %p105, %p106
      %p108 = scmp.ne.s32.totalorder %s96, %s97
      %p109 = scmp.eq.s32.totalorder %s24, 1
      %p110 = por %p108, %p109
      %p112 = scmp.ne.s32.totalorder %s97, %s111
      %p113 = scmp.eq.s32.totalorder %s24, 0
      %p114 = por %p112, %p113
      %s116 = sadd.s32 %s115, 1
      %p119 = scmp.eq.s32.totalorder %s18, 1
      %p120 = scmp.ne.s32.totalorder %s115, %s117
      %p121 = scmp.eq.s32.totalorder %s18, 0
      %p122 = por %p120, %p121
      %p123 = scmp.ne.s32.totalorder %s115, %s117
      %p124 = scmp.eq.s32.totalorder %s23, 1
      %p125 = por %p123, %p124
      %p126 = scmp.ne.s32.totalorder %s117, %s118
      %p127 = scmp.eq.s32.totalorder %s23, 0
      %p128 = por %p126, %p127
      %p129 = scmp.ne.s32.totalorder %s117, %s118
      %p130 = scmp.eq.s32.totalorder %s24, 1
      %p131 = por %p129, %p130
      %p133 = scmp.ne.s32.totalorder %s118, %s132
      %p134 = scmp.eq.s32.totalorder %s24, 0
      %p135 = por %p133, %p134
      %s137 = sadd.s32 %s136, 1
      %p140 = scmp.eq.s32.totalorder %s18, 1
      %p141 = scmp.ne.s32.totalorder %s136, %s138
      %p142 = scmp.eq.s32.totalorder %s18, 0
      %p143 = por %p141, %p142
      %p144 = scmp.ne.s32.totalorder %s136, %s138
      %p145 = scmp.eq.s32.totalorder %s23, 1
      %p146 = por %p144, %p145
      %p147 = scmp.ne.s32.totalorder %s138, %s139
      %p148 = scmp.eq.s32.totalorder %s23, 0
      %p149 = por %p147, %p148
      %p150 = scmp.ne.s32.totalorder %s138, %s139
      %p151 = scmp.eq.s32.totalorder %s24, 1
      %p152 = por %p150, %p151
      %p154 = scmp.ne.s32.totalorder %s139, %s153
      %p155 = scmp.eq.s32.totalorder %s24, 0
      %p156 = por %p154, %p155
      %s158 = sadd.s32 %s157, 1
      %p161 = scmp.eq.s32.totalorder %s18, 1
      %p162 = scmp.ne.s32.totalorder %s157, %s159
      %p163 = scmp.eq.s32.totalorder %s18, 0
      %p164 = por %p162, %p163
      %p165 = scmp.ne.s32.totalorder %s157, %s159
      %p166 = scmp.eq.s32.totalorder %s23, 1
      %p167 = por %p165, %p166
      %p168 = scmp.ne.s32.totalorder %s159, %s160
      %p169 = scmp.eq.s32.totalorder %s23, 0
      %p170 = por %p168, %p169
      %p171 = scmp.ne.s32.totalorder %s159, %s160
      %p172 = scmp.eq.s32.totalorder %s24, 1
      %p173 = por %p171, %p172
      %p175 = scmp.ne.s32.totalorder %s160, %s174
      %p176 = scmp.eq.s32.totalorder %s24, 0
      %p177 = por %p175, %p176
      %s178 = ssub.s32 %s18, %s25
      %p179 = scmp.eq.s32.totalorder %s178, 0
      %s181 = sadd.s32 %s180, 1
      %s182 = scalar_select %p179, %s180, %s181
      %p185 = pneg %p179
      %p186 = scmp.eq.s32.totalorder %s18, 1
      %p187 = por %p185, %p186
      %p188 = scmp.ne.s32.totalorder %s180, %s183
      %p189 = scmp.eq.s32.totalorder %s18, 0
      %p190 = por %p188, %p189
      %p191 = scmp.ne.s32.totalorder %s180, %s183
      %p192 = scmp.eq.s32.totalorder %s23, 1
      %p193 = por %p191, %p192
      %p194 = scmp.ne.s32.totalorder %s183, %s184
      %p195 = scmp.eq.s32.totalorder %s23, 0
      %p196 = por %p194, %p195
      %p197 = scmp.ne.s32.totalorder %s183, %s184
      %p198 = scmp.eq.s32.totalorder %s24, 1
      %p199 = por %p197, %p198
      %p201 = scmp.ne.s32.totalorder %s184, %s200
      %p202 = scmp.eq.s32.totalorder %s24, 0
      %p203 = por %p201, %p202
      %p204 = scmp.le.s32.totalorder 1, %s18
      %p205 = scmp.lt.s32.totalorder %s18, 3
      %p206 = pnand %p204, %p205
      %p207 = pneg %p206
      // Predicated region
      $region9: #{tpu_custom_call.1} parent=5 // pred_check
        _
      $region10: #{tpu_custom_call.1} parent=5 // pred_check_branch
        %209 = sbr.rel (%p206) target = $region12
      $region11: #{tpu_custom_call.1} parent=5 // pred_region
        %s210 = ssub.s32 %s18, 1
        // Predicated region
        $region13: #{tpu_custom_call.1} parent=11 // pred_check
          %p211 = pneg %p65
        $region14: #{tpu_custom_call.1} parent=11 // pred_check_branch
          %213 = sbr.rel (%p211) target = $region16
        $region15: #{tpu_custom_call.1} parent=11 // pred_region
          %s215 = ssub.s32 2048, 2048
          %216 = vsyncadd [#allocation5], %s215
          %s217 = sshll.u32 [#allocation4], 4
          %s218 = int_to_ptr.vmem [resolvable:$true] %s217
          %223 = dma.hbm_to_vmem [thread:$0]  %s1, 2048, %s218, [#allocation5], 128, 128, 8
        $region16: #{tpu_custom_call.1} parent=11 // pred_fallthru
          _
        // Predicated region
        $region17: #{tpu_custom_call.1} parent=11 // pred_check
          %p224 = pneg %p86
        $region18: #{tpu_custom_call.1} parent=11 // pred_check_branch
          %226 = sbr.rel (%p224) target = $region20
        $region19: #{tpu_custom_call.1} parent=11 // pred_region
          _
        $region20: #{tpu_custom_call.1} parent=11 // pred_fallthru
          _
        // Predicated region
        $region21: #{tpu_custom_call.1} parent=11 // pred_check
          %p227 = pneg %p107
        $region22: #{tpu_custom_call.1} parent=11 // pred_check_branch
          %229 = sbr.rel (%p227) target = $region24
        $region23: #{tpu_custom_call.1} parent=11 // pred_region
          %s231 = ssub.s32 2048, 2048
          %232 = vsyncadd [#allocation5], %s231
          %s233 = sshll.u32 [#allocation6], 4
          %s234 = int_to_ptr.vmem [resolvable:$true] %s233
          %239 = dma.hbm_to_vmem [thread:$0]  %s3, 2048, %s234, [#allocation5], 128, 128, 8
        $region24: #{tpu_custom_call.1} parent=11 // pred_fallthru
          _
        // Predicated region
        $region25: #{tpu_custom_call.1} parent=11 // pred_check
          %p240 = pneg %p128
        $region26: #{tpu_custom_call.1} parent=11 // pred_check_branch
          %242 = sbr.rel (%p240) target = $region28
        $region27: #{tpu_custom_call.1} parent=11 // pred_region
          _
        $region28: #{tpu_custom_call.1} parent=11 // pred_fallthru
          _
        // Predicated region
        $region29: #{tpu_custom_call.1} parent=11 // pred_check
          %p243 = pneg %p149
        $region30: #{tpu_custom_call.1} parent=11 // pred_check_branch
          %245 = sbr.rel (%p243) target = $region32
        $region31: #{tpu_custom_call.1} parent=11 // pred_region
          %s247 = ssub.s32 2048, 2048
          %248 = vsyncadd [#allocation8], %s247
          %s249 = sshll.u32 [#allocation7], 4
          %s250 = int_to_ptr.vmem [resolvable:$true] %s249
          %255 = dma.hbm_to_vmem [thread:$0]  %s5, 2048, %s250, [#allocation8], 128, 128, 8
        $region32: #{tpu_custom_call.1} parent=11 // pred_fallthru
          _
        // Predicated region
        $region33: #{tpu_custom_call.1} parent=11 // pred_check
          %p256 = pneg %p170
        $region34: #{tpu_custom_call.1} parent=11 // pred_check_branch
          %258 = sbr.rel (%p256) target = $region36
        $region35: #{tpu_custom_call.1} parent=11 // pred_region
          _
        $region36: #{tpu_custom_call.1} parent=11 // pred_fallthru
          _
      $region12: #{tpu_custom_call.1} parent=5 // pred_fallthru
        _
      %p259 = scmp.lt.s32.totalorder %s18, 2
      // Predicated region
      $region37: #{tpu_custom_call.1} parent=5 // pred_check
        %p260 = pneg %p259
      $region38: #{tpu_custom_call.1} parent=5 // pred_check_branch
        %262 = sbr.rel (%p260) target = $region40
      $region39: #{tpu_custom_call.1} parent=5 // pred_region
        // Predicated region
        $region41: #{tpu_custom_call.1} parent=39 // pred_check
          %p263 = pneg %p38
        $region42: #{tpu_custom_call.1} parent=39 // pred_check_branch
          %265 = sbr.rel (%p263) target = $region44
        $region43: #{tpu_custom_call.1} parent=39 // pred_region
          %s266 = sand.u32 %s28, 1
          %s267 = scalar_lea.sflag [#allocation3], %s266
          %s268 = sand.u32 %s28, 1
          %s269 = smul.addr %s268, 8
          %s270 = scalar_lea.vmem [#allocation2], %s269
          %s272 = ssub.s32 128, 128
          %273 = vsyncadd %s267, %s272
          %s274 = smul.addr %s18, 128
          %s275 = scalar_lea.hbm %s0, %s274
          %s277 = sshll.u32 %s270, 4
          %s278 = int_to_ptr.vmem [resolvable:$true] %s277
          %280 = dma.hbm_to_vmem [thread:$0]  %s275, 128, %s278, %s267
        $region44: #{tpu_custom_call.1} parent=39 // pred_fallthru
          _
      $region40: #{tpu_custom_call.1} parent=5 // pred_fallthru
        _
      %p281 = scmp.le.s32.totalorder 1, %s18
      %p282 = scmp.lt.s32.totalorder %s18, 3
      %p283 = pnand %p281, %p282
      %p284 = pneg %p283
      // Predicated region
      $region45: #{tpu_custom_call.1} parent=5 // pred_check
        _
      $region46: #{tpu_custom_call.1} parent=5 // pred_check_branch
        %286 = sbr.rel (%p283) target = $region48
      $region47: #{tpu_custom_call.1} parent=5 // pred_region
        %s287 = ssub.s32 %s18, 1
        %s288 = sand.u32 %s31, 1
        %s289 = scalar_lea.sflag [#allocation3], %s288
        %s290 = sand.u32 %s31, 1
        %s291 = smul.addr %s290, 8
        %s292 = scalar_lea.vmem [#allocation2], %s291
        // Predicated region
        $region49: #{tpu_custom_call.1} parent=47 // pred_check
          %p293 = pneg %p44
        $region50: #{tpu_custom_call.1} parent=47 // pred_check_branch
          %295 = sbr.rel (%p293) target = $region52
        $region51: #{tpu_custom_call.1} parent=47 // pred_region
          %296 = dma.done %s289, 128
        $region52: #{tpu_custom_call.1} parent=47 // pred_fallthru
          _
        // Predicated region
        $region53: #{tpu_custom_call.1} parent=47 // pred_check
          %p297 = pneg %p65
        $region54: #{tpu_custom_call.1} parent=47 // pred_check_branch
          %299 = sbr.rel (%p297) target = $region56
        $region55: #{tpu_custom_call.1} parent=47 // pred_region
          %300 = dma.done [#allocation5], 2048
        $region56: #{tpu_custom_call.1} parent=47 // pred_fallthru
          _
        // Predicated region
        $region57: #{tpu_custom_call.1} parent=47 // pred_check
          %p301 = pneg %p107
        $region58: #{tpu_custom_call.1} parent=47 // pred_check_branch
          %303 = sbr.rel (%p301) target = $region60
        $region59: #{tpu_custom_call.1} parent=47 // pred_region
          %304 = dma.done [#allocation5], 2048
        $region60: #{tpu_custom_call.1} parent=47 // pred_fallthru
          _
        // Predicated region
        $region61: #{tpu_custom_call.1} parent=47 // pred_check
          %p305 = pneg %p149
        $region62: #{tpu_custom_call.1} parent=47 // pred_check_branch
          %307 = sbr.rel (%p305) target = $region64
        $region63: #{tpu_custom_call.1} parent=47 // pred_region
          %308 = dma.done [#allocation8], 2048
        $region64: #{tpu_custom_call.1} parent=47 // pred_fallthru
          _
        %s309 = sand.u32 %s31, 1
        %s310 = scalar_lea.sflag [#allocation3], %s309
        %s311 = sand.u32 %s31, 1
        %s312 = smul.addr %s311, 8
        %s313 = scalar_lea.vmem [#allocation2], %s312
        %p314 = pneg %p44
        %p315 = pneg %p41
        %p316 = pneg %p65
        %p317 = pneg %p62
        %p318 = pneg %p86
        %p319 = pneg %p83
        %p320 = pneg %p107
        %p321 = pneg %p104
        %p322 = pneg %p128
        %p323 = pneg %p125
        %p324 = pneg %p149
        %p325 = pneg %p146
        %p326 = pneg %p170
        %p327 = pneg %p167
        %p328 = pneg %p196
        %p329 = pneg %p193
        %p330 = scmp.lt.s32.totalorder %s23, 1
        %s331 = scalar_select %p330, %s23, 1
        %s332 = smul.addr %s331, 8
        %s333 = scalar_lea.vmem %s7, %s332
        %p334 = scmp.lt.s32.totalorder %s23, 1
        %s335 = scalar_select %p334, %s23, 1
        %s336 = smul.addr %s335, 8
        %s337 = scalar_lea.vmem %s7, %s336
        %v338 = vld [vmem:[%s292] sm:$0xff]
        %v339 = vld [vmem:[#allocation4] sm:$0xff]
        %v340 = vld [vmem:[#allocation4 + $0x8] sm:$0xff]
        %v341 = vld [vmem:[#allocation4 + $0x10] sm:$0xff]
        %v342 = vld [vmem:[#allocation4 + $0x18] sm:$0xff]
        %v343 = vld [vmem:[#allocation4 + $0x20] sm:$0xff]
        %v344 = vld [vmem:[#allocation4 + $0x28] sm:$0xff]
        %v345 = vld [vmem:[#allocation4 + $0x30] sm:$0xff]
        %v346 = vld [vmem:[#allocation4 + $0x38] sm:$0xff]
        %v347 = vld [vmem:[#allocation4 + $0x40] sm:$0xff]
        %v348 = vld [vmem:[#allocation4 + $0x48] sm:$0xff]
        %v349 = vld [vmem:[#allocation4 + $0x50] sm:$0xff]
        %v350 = vld [vmem:[#allocation4 + $0x58] sm:$0xff]
        %v351 = vld [vmem:[#allocation4 + $0x60] sm:$0xff]
        %v352 = vld [vmem:[#allocation4 + $0x68] sm:$0xff]
        %v353 = vld [vmem:[#allocation4 + $0x70] sm:$0xff]
        %v354 = vld [vmem:[#allocation4 + $0x78] sm:$0xff]
        %v355 = vld [vmem:[%s2] sm:$0x1]
        %v357 = vlaneseq
        %v358 = vshrl.u32 %v357, 7
        %v359 = vsub.s32 0, %v358
        %v360 = vrot.slane %v355, %v359
        %362 = vmatprep.subr.mxu0 0.0
        %363 = vmatpush1.msra.mxu0 %v339
        %364 = vmatprep.subr.mxu0 0.0
        %365 = vmatpush1.msra.mxu0 %v340
        %366 = vmatprep.subr.mxu0 0.0
        %367 = vmatpush1.msra.mxu0 %v341
        %368 = vmatprep.subr.mxu0 0.0
        %369 = vmatpush1.msra.mxu0 %v342
        %370 = vmatprep.subr.mxu0 0.0
        %371 = vmatpush1.msra.mxu0 %v343
        %372 = vmatprep.subr.mxu0 0.0
        %373 = vmatpush1.msra.mxu0 %v344
        %374 = vmatprep.subr.mxu0 0.0
        %375 = vmatpush1.msra.mxu0 %v345
        %376 = vmatprep.subr.mxu0 0.0
        %377 = vmatpush1.msra.mxu0 %v346
        %378 = vmatprep.subr.mxu0 0.0
        %379 = vmatpush1.msra.mxu0 %v347
        %380 = vmatprep.subr.mxu0 0.0
        %381 = vmatpush1.msra.mxu0 %v348
        %382 = vmatprep.subr.mxu0 0.0
        %383 = vmatpush1.msra.mxu0 %v349
        %384 = vmatprep.subr.mxu0 0.0
        %385 = vmatpush1.msra.mxu0 %v350
        %386 = vmatprep.subr.mxu0 0.0
        %387 = vmatpush1.msra.mxu0 %v351
        %388 = vmatprep.subr.mxu0 0.0
        %389 = vmatpush1.msra.mxu0 %v352
        %390 = vmatprep.subr.mxu0 0.0
        %391 = vmatpush1.msra.mxu0 %v353
        %392 = vmatprep.subr.mxu0 0.0
        %393 = vmatpush1.msra.mxu0 %v354
        %394 = vmatprep.subr.mxu0 0.0
        %395 = vmatpush1.msra.mxu0 0.0
        %396 = vmatprep.subr.mxu0 0.0
        %397 = vmatpush1.msra.mxu0 0.0
        %398 = vmatprep.subr.mxu0 0.0
        %399 = vmatpush1.msra.mxu0 0.0
        %400 = vmatprep.subr.mxu0 0.0
        %401 = vmatpush1.msra.mxu0 0.0
        %402 = vmatprep.subr.mxu0 0.0
        %403 = vmatpush1.msra.mxu0 0.0
        %404 = vmatprep.subr.mxu0 0.0
        %405 = vmatpush1.msra.mxu0 0.0
        %406 = vmatprep.subr.mxu0 0.0
        %407 = vmatpush1.msra.mxu0 0.0
        %408 = vmatprep.subr.mxu0 0.0
        %409 = vmatpush1.msra.mxu0 0.0
        %410 = vmatprep.subr.mxu0 0.0
        %411 = vmatpush1.msra.mxu0 0.0
        %412 = vmatprep.subr.mxu0 0.0
        %413 = vmatpush1.msra.mxu0 0.0
        %414 = vmatprep.subr.mxu0 0.0
        %415 = vmatpush1.msra.mxu0 0.0
        %416 = vmatprep.subr.mxu0 0.0
        %417 = vmatpush1.msra.mxu0 0.0
        %418 = vmatprep.subr.mxu0 0.0
        %419 = vmatpush1.msra.mxu0 0.0
        %420 = vmatprep.subr.mxu0 0.0
        %421 = vmatpush1.msra.mxu0 0.0
        %422 = vmatprep.subr.mxu0 0.0
        %423 = vmatpush1.msra.mxu0 0.0
        %424 = vmatprep.subr.mxu0 0.0
        %425 = vmatpush1.msra.mxu0 0.0
        %426 = vmatprep.mubr.f32.mxu0 0.0
        %427 = vmatmul.mubr.f32.gmra.mrb[0].mxu0 %v338
        %v428 = vpop.f32.mrb[0].mxu0
        %v429 = vadd.f32 %v360, %v428
        %v430 = vpop.f32.mrb[0].mxu0
        %431 = vdwg.mxu0
        %v432 = vsub.f32 0.0, %v429
        %v433 = vmul.f32 %v432, 1.442695
        %v434 = vpow.pop %v433
        %v435 = vadd.f32 %v434, 1.0
        %v436 = vrcp.pop %v435
        %v437 = vld [vmem:[#allocation6] sm:$0xff]
        %v438 = vld [vmem:[#allocation6 + $0x8] sm:$0xff]
        %v439 = vld [vmem:[#allocation6 + $0x10] sm:$0xff]
        %v440 = vld [vmem:[#allocation6 + $0x18] sm:$0xff]
        %v441 = vld [vmem:[#allocation6 + $0x20] sm:$0xff]
        %v442 = vld [vmem:[#allocation6 + $0x28] sm:$0xff]
        %v443 = vld [vmem:[#allocation6 + $0x30] sm:$0xff]
        %v444 = vld [vmem:[#allocation6 + $0x38] sm:$0xff]
        %v445 = vld [vmem:[#allocation6 + $0x40] sm:$0xff]
        %v446 = vld [vmem:[#allocation6 + $0x48] sm:$0xff]
        %v447 = vld [vmem:[#allocation6 + $0x50] sm:$0xff]
        %v448 = vld [vmem:[#allocation6 + $0x58] sm:$0xff]
        %v449 = vld [vmem:[#allocation6 + $0x60] sm:$0xff]
        %v450 = vld [vmem:[#allocation6 + $0x68] sm:$0xff]
        %v451 = vld [vmem:[#allocation6 + $0x70] sm:$0xff]
        %v452 = vld [vmem:[#allocation6 + $0x78] sm:$0xff]
        %v453 = vld [vmem:[%s4] sm:$0x1]
        %v455 = vlaneseq
        %v456 = vshrl.u32 %v455, 7
        %v457 = vsub.s32 0, %v456
        %v458 = vrot.slane %v453, %v457
        %460 = vmatprep.subr.mxu0 0.0
        %461 = vmatpush1.msra.mxu0 %v437
        %462 = vmatprep.subr.mxu0 0.0
        %463 = vmatpush1.msra.mxu0 %v438
        %464 = vmatprep.subr.mxu0 0.0
        %465 = vmatpush1.msra.mxu0 %v439
        %466 = vmatprep.subr.mxu0 0.0
        %467 = vmatpush1.msra.mxu0 %v440
        %468 = vmatprep.subr.mxu0 0.0
        %469 = vmatpush1.msra.mxu0 %v441
        %470 = vmatprep.subr.mxu0 0.0
        %471 = vmatpush1.msra.mxu0 %v442
        %472 = vmatprep.subr.mxu0 0.0
        %473 = vmatpush1.msra.mxu0 %v443
        %474 = vmatprep.subr.mxu0 0.0
        %475 = vmatpush1.msra.mxu0 %v444
        %476 = vmatprep.subr.mxu0 0.0
        %477 = vmatpush1.msra.mxu0 %v445
        %478 = vmatprep.subr.mxu0 0.0
        %479 = vmatpush1.msra.mxu0 %v446
        %480 = vmatprep.subr.mxu0 0.0
        %481 = vmatpush1.msra.mxu0 %v447
        %482 = vmatprep.subr.mxu0 0.0
        %483 = vmatpush1.msra.mxu0 %v448
        %484 = vmatprep.subr.mxu0 0.0
        %485 = vmatpush1.msra.mxu0 %v449
        %486 = vmatprep.subr.mxu0 0.0
        %487 = vmatpush1.msra.mxu0 %v450
        %488 = vmatprep.subr.mxu0 0.0
        %489 = vmatpush1.msra.mxu0 %v451
        %490 = vmatprep.subr.mxu0 0.0
        %491 = vmatpush1.msra.mxu0 %v452
        %492 = vmatprep.subr.mxu0 0.0
        %493 = vmatpush1.msra.mxu0 0.0
        %494 = vmatprep.subr.mxu0 0.0
        %495 = vmatpush1.msra.mxu0 0.0
        %496 = vmatprep.subr.mxu0 0.0
        %497 = vmatpush1.msra.mxu0 0.0
        %498 = vmatprep.subr.mxu0 0.0
        %499 = vmatpush1.msra.mxu0 0.0
        %500 = vmatprep.subr.mxu0 0.0
        %501 = vmatpush1.msra.mxu0 0.0
        %502 = vmatprep.subr.mxu0 0.0
        %503 = vmatpush1.msra.mxu0 0.0
        %504 = vmatprep.subr.mxu0 0.0
        %505 = vmatpush1.msra.mxu0 0.0
        %506 = vmatprep.subr.mxu0 0.0
        %507 = vmatpush1.msra.mxu0 0.0
        %508 = vmatprep.subr.mxu0 0.0
        %509 = vmatpush1.msra.mxu0 0.0
        %510 = vmatprep.subr.mxu0 0.0
        %511 = vmatpush1.msra.mxu0 0.0
        %512 = vmatprep.subr.mxu0 0.0
        %513 = vmatpush1.msra.mxu0 0.0
        %514 = vmatprep.subr.mxu0 0.0
        %515 = vmatpush1.msra.mxu0 0.0
        %516 = vmatprep.subr.mxu0 0.0
        %517 = vmatpush1.msra.mxu0 0.0
        %518 = vmatprep.subr.mxu0 0.0
        %519 = vmatpush1.msra.mxu0 0.0
        %520 = vmatprep.subr.mxu0 0.0
        %521 = vmatpush1.msra.mxu0 0.0
        %522 = vmatprep.subr.mxu0 0.0
        %523 = vmatpush1.msra.mxu0 0.0
        %524 = vmatprep.mubr.f32.mxu0 0.0
        %525 = vmatmul.mubr.f32.gmra.mrb[0].mxu0 %v436
        %v526 = vpop.f32.mrb[0].mxu0
        %v527 = vadd.f32 %v458, %v526
        %v528 = vpop.f32.mrb[0].mxu0
        %529 = vdwg.mxu0
        %v530 = vsub.f32 0.0, %v527
        %v531 = vmul.f32 %v530, 1.442695
        %v532 = vpow.pop %v531
        %v533 = vadd.f32 %v532, 1.0
        %v534 = vrcp.pop %v533
        %v535 = vld [vmem:[#allocation7] sm:$0xff]
        %v536 = vld [vmem:[#allocation7 + $0x8] sm:$0xff]
        %v537 = vld [vmem:[#allocation7 + $0x10] sm:$0xff]
        %v538 = vld [vmem:[#allocation7 + $0x18] sm:$0xff]
        %v539 = vld [vmem:[#allocation7 + $0x20] sm:$0xff]
        %v540 = vld [vmem:[#allocation7 + $0x28] sm:$0xff]
        %v541 = vld [vmem:[#allocation7 + $0x30] sm:$0xff]
        %v542 = vld [vmem:[#allocation7 + $0x38] sm:$0xff]
        %v543 = vld [vmem:[#allocation7 + $0x40] sm:$0xff]
        %v544 = vld [vmem:[#allocation7 + $0x48] sm:$0xff]
        %v545 = vld [vmem:[#allocation7 + $0x50] sm:$0xff]
        %v546 = vld [vmem:[#allocation7 + $0x58] sm:$0xff]
        %v547 = vld [vmem:[#allocation7 + $0x60] sm:$0xff]
        %v548 = vld [vmem:[#allocation7 + $0x68] sm:$0xff]
        %v549 = vld [vmem:[#allocation7 + $0x70] sm:$0xff]
        %v550 = vld [vmem:[#allocation7 + $0x78] sm:$0xff]
        %v551 = vld [vmem:[%s6] sm:$0x1]
        %v553 = vlaneseq
        %v554 = vshrl.u32 %v553, 7
        %v555 = vsub.s32 0, %v554
        %v556 = vrot.slane %v551, %v555
        %558 = vmatprep.subr.mxu0 0.0
        %559 = vmatpush1.msra.mxu0 %v535
        %560 = vmatprep.subr.mxu0 0.0
        %561 = vmatpush1.msra.mxu0 %v536
        %562 = vmatprep.subr.mxu0 0.0
        %563 = vmatpush1.msra.mxu0 %v537
        %564 = vmatprep.subr.mxu0 0.0
        %565 = vmatpush1.msra.mxu0 %v538
        %566 = vmatprep.subr.mxu0 0.0
        %567 = vmatpush1.msra.mxu0 %v539
        %568 = vmatprep.subr.mxu0 0.0
        %569 = vmatpush1.msra.mxu0 %v540
        %570 = vmatprep.subr.mxu0 0.0
        %571 = vmatpush1.msra.mxu0 %v541
        %572 = vmatprep.subr.mxu0 0.0
        %573 = vmatpush1.msra.mxu0 %v542
        %574 = vmatprep.subr.mxu0 0.0
        %575 = vmatpush1.msra.mxu0 %v543
        %576 = vmatprep.subr.mxu0 0.0
        %577 = vmatpush1.msra.mxu0 %v544
        %578 = vmatprep.subr.mxu0 0.0
        %579 = vmatpush1.msra.mxu0 %v545
        %580 = vmatprep.subr.mxu0 0.0
        %581 = vmatpush1.msra.mxu0 %v546
        %582 = vmatprep.subr.mxu0 0.0
        %583 = vmatpush1.msra.mxu0 %v547
        %584 = vmatprep.subr.mxu0 0.0
        %585 = vmatpush1.msra.mxu0 %v548
        %586 = vmatprep.subr.mxu0 0.0
        %587 = vmatpush1.msra.mxu0 %v549
        %588 = vmatprep.subr.mxu0 0.0
        %589 = vmatpush1.msra.mxu0 %v550
        %590 = vmatprep.subr.mxu0 0.0
        %591 = vmatpush1.msra.mxu0 0.0
        %592 = vmatprep.subr.mxu0 0.0
        %593 = vmatpush1.msra.mxu0 0.0
        %594 = vmatprep.subr.mxu0 0.0
        %595 = vmatpush1.msra.mxu0 0.0
        %596 = vmatprep.subr.mxu0 0.0
        %597 = vmatpush1.msra.mxu0 0.0
        %598 = vmatprep.subr.mxu0 0.0
        %599 = vmatpush1.msra.mxu0 0.0
        %600 = vmatprep.subr.mxu0 0.0
        %601 = vmatpush1.msra.mxu0 0.0
        %602 = vmatprep.subr.mxu0 0.0
        %603 = vmatpush1.msra.mxu0 0.0
        %604 = vmatprep.subr.mxu0 0.0
        %605 = vmatpush1.msra.mxu0 0.0
        %606 = vmatprep.subr.mxu0 0.0
        %607 = vmatpush1.msra.mxu0 0.0
        %608 = vmatprep.subr.mxu0 0.0
        %609 = vmatpush1.msra.mxu0 0.0
        %610 = vmatprep.subr.mxu0 0.0
        %611 = vmatpush1.msra.mxu0 0.0
        %612 = vmatprep.subr.mxu0 0.0
        %613 = vmatpush1.msra.mxu0 0.0
        %614 = vmatprep.subr.mxu0 0.0
        %615 = vmatpush1.msra.mxu0 0.0
        %616 = vmatprep.subr.mxu0 0.0
        %617 = vmatpush1.msra.mxu0 0.0
        %618 = vmatprep.subr.mxu0 0.0
        %619 = vmatpush1.msra.mxu0 0.0
        %620 = vmatprep.subr.mxu0 0.0
        %621 = vmatpush1.msra.mxu0 0.0
        %622 = vmatprep.mubr.f32.mxu0 0.0
        %623 = vmatmul.mubr.f32.gmra.mrb[0].mxu0 %v534
        %v624 = vpop.f32.mrb[0].mxu0
        %v625 = vadd.f32 %v556, %v624
        %v626 = vpop.f32.mrb[0].mxu0
        %627 = vdwg.mxu0
        %vm628 = vcmask 64512
        %629 = vst.msk [vmem:[%s337] sm:$0xff] %vm628, %v625
        %p630 = scmp.lt.s32.totalorder %s23, 1
        %s631 = scalar_select %p630, %s23, 1
        %s632 = smul.addr %s631, 8
        %s633 = scalar_lea.vmem %s7, %s632
        // Predicated region
        $region65: #{tpu_custom_call.1} parent=47 // pred_check
          %p634 = pneg %p193
        $region66: #{tpu_custom_call.1} parent=47 // pred_check_branch
          %636 = sbr.rel (%p634) target = $region68
        $region67: #{tpu_custom_call.1} parent=47 // pred_region
          _
        $region68: #{tpu_custom_call.1} parent=47 // pred_fallthru
          _
      $region48: #{tpu_custom_call.1} parent=5 // pred_fallthru
        _
      %p637 = scmp.le.s32.totalorder 2, %s18
      // Predicated region
      $region69: #{tpu_custom_call.1} parent=5 // pred_check
        %p638 = pneg %p637
      $region70: #{tpu_custom_call.1} parent=5 // pred_check_branch
        %640 = sbr.rel (%p638) target = $region72
      $region71: #{tpu_custom_call.1} parent=5 // pred_region
        %s641 = ssub.s32 %s18, 2
        // Predicated region
        $region73: #{tpu_custom_call.1} parent=71 // pred_check
          %p642 = pneg %p199
        $region74: #{tpu_custom_call.1} parent=71 // pred_check_branch
          %644 = sbr.rel (%p642) target = $region76
        $region75: #{tpu_custom_call.1} parent=71 // pred_region
          %p645 = scmp.lt.s32.totalorder %s24, 1
          %s646 = scalar_select %p645, %s24, 1
          %s647 = smul.addr %s646, 8
          %s648 = scalar_lea.vmem %s7, %s647
        $region76: #{tpu_custom_call.1} parent=71 // pred_fallthru
          _
      $region72: #{tpu_custom_call.1} parent=5 // pred_fallthru
        _
    $region6: #{tpu_custom_call.1} parent=1 // loop_footer
      %s22 = sadd.s32 1, %s18
    $region7: #{tpu_custom_call.1} parent=1 // loop_footer_branch
      %17 = sbr.rel target = $region3
    $region8: #{tpu_custom_call.1} parent=1 // loop_exit
      _
    %649 = vsyncpa [#allocation3], 1
    %s650 = scalar_lea.sflag [#allocation3], 1
    %651 = vsyncpa %s650, 1
    %652 = vsyncpa [#allocation5], 1
    %653 = vsyncpa [#allocation8], 1

</llo_original>
